<compile_context>
chip_gen: v6e
topology: v6e:2x2x1
jax: 0.10.0
libtpu: 0.0.40
codegen_flags: <defaults>
</compile_context>

<pallas_src>
import functools

import jax
import jax.numpy as jnp
from jax.experimental import pallas as pl
from jax.experimental.pallas import tpu as pltpu

_LANE = 128
_SCOPED_VMEM_BYTES = 32 << 20   # <= physical VMEM on v5e/v6e/v7x; raises v5e's 16 MiB default


def _round_up(x: int, m: int) -> int:
    return (x + m - 1) // m * m


def _vmem_block_cap_bytes() -> int:
    """Per-block byte cap, generation aware (best effort, safe fallback)."""
    cap = 4 << 20                       # fits every generation under a 32 MiB scoped limit
    try:
        info = pltpu.get_tpu_info()
        vmem = getattr(info, "vmem_capacity_bytes", None)
        if vmem is not None and vmem >= (96 << 20):   # v5e / v6e (128 MiB VMEM)
            cap = 6 << 20
    except Exception:
        pass
    return cap


def _choose_spatial_tile(hw_pad: int, c: int, itemsize: int, cap_bytes: int) -> int:
    """Largest multiple-of-128 divisor of hw_pad with c*thw*itemsize <= cap."""
    best = _LANE
    t = _LANE
    while t <= hw_pad:
        if hw_pad % t == 0 and c * t * itemsize <= cap_bytes:
            best = t
        t += _LANE
    return best


# ----------------------------- kernels -------------------------------------


def _se_fused_kernel(x_ref, w1_ref, b1_ref, w2_ref, b2_ref, o_ref, *, inv_hw: float):
    # x_ref/o_ref: (1, c, hw_pad); w1: (sq, c); b1: (sq, 1); w2: (c, sq); b2: (c, 1)
    x = x_ref[0]                                                        # (c, hw_pad)
    mean = jnp.sum(x.astype(jnp.float32), axis=-1, keepdims=True) * inv_hw  # (c, 1)
    h = jnp.dot(w1_ref[...].astype(jnp.float32), mean,
                preferred_element_type=jnp.float32) + b1_ref[...].astype(jnp.float32)
    h = jnp.maximum(h, 0.0)                                             # (sq, 1)
    z = jnp.dot(w2_ref[...].astype(jnp.float32), h,
                preferred_element_type=jnp.float32) + b2_ref[...].astype(jnp.float32)
    s = jax.nn.sigmoid(z).astype(x.dtype)                               # (c, 1)
    o_ref[0] = (x * s).astype(o_ref.dtype)


def _se_pool_kernel(x_ref, sums_ref):
    # x_ref: (1, c, thw); sums_ref: (1, 1, c, 1) — resident across the spatial axis.
    j = pl.program_id(2)
    part = jnp.sum(x_ref[0].astype(jnp.float32), axis=-1, keepdims=True)  # (c, 1)

    @pl.when(j == 0)
    def _init():
        sums_ref[0, 0] = part

    @pl.when(j != 0)
    def _acc():
        sums_ref[0, 0] += part


def _se_scale_kernel(x_ref, scale_ref, o_ref):
    # x_ref/o_ref: (1, c, thw); scale_ref: (1, c, 1)
    s = scale_ref[0].astype(x_ref.dtype)                # keep big multiply in x dtype
    o_ref[0] = (x_ref[0] * s).astype(o_ref.dtype)


# ----------------------------- wrapper --------------------------------------


def se_pallas(x, w1, b1, w2, b2, *, force_two_pass: bool = False,
              max_block_bytes: int | None = None):
    """SE forward. x: (b, c, h, w); w1: (sq, c); b1: (sq,); w2: (c, sq); b2: (c,)."""
    b, c, h, w = x.shape
    hw = h * w
    squeeze_c = w1.shape[0]
    assert w1.shape == (squeeze_c, c) and w2.shape == (c, squeeze_c)
    assert b1.shape == (squeeze_c,) and b2.shape == (c,)

    cap = max_block_bytes if max_block_bytes is not None else _vmem_block_cap_bytes()
    itemsize = x.dtype.itemsize
    inv_hw = 1.0 / float(hw)

    # Lane-dense layout; zero-pad spatial to a multiple of 128 (sum unchanged).
    hw_pad = _round_up(hw, _LANE)
    x3 = x.reshape(b, c, hw)
    if hw_pad != hw:
        x3 = jnp.pad(x3, ((0, 0), (0, 0), (0, hw_pad - hw)))

    b1r = b1.reshape(squeeze_c, 1)
    b2r = b2.reshape(c, 1)

    # ---- Fused single pass: x read once, gate never touches HBM ----
    if (not force_two_pass) and (c * hw_pad * 4 <= cap):
        out = pl.pallas_call(
            functools.partial(_se_fused_kernel, inv_hw=inv_hw),
            out_shape=jax.ShapeDtypeStruct((b, c, hw_pad), x.dtype),
            grid_spec=pltpu.PrefetchScalarGridSpec(
                num_scalar_prefetch=0,
                grid=(b,),
                in_specs=[
                    pl.BlockSpec((1, c, hw_pad), lambda i: (i, 0, 0)),
                    pl.BlockSpec((squeeze_c, c), lambda i: (0, 0)),
                    pl.BlockSpec((squeeze_c, 1), lambda i: (0, 0)),
                    pl.BlockSpec((c, squeeze_c), lambda i: (0, 0)),
                    pl.BlockSpec((c, 1), lambda i: (0, 0)),
                ],
                out_specs=pl.BlockSpec((1, c, hw_pad), lambda i: (i, 0, 0)),
            ),
            compiler_params=pltpu.CompilerParams(
                dimension_semantics=("parallel",),
                vmem_limit_bytes=_SCOPED_VMEM_BYTES),
        )(x3, w1, b1r, w2, b2r)
        return out[:, :, :hw].reshape(b, c, h, w)

    # ---- Two-pass fallback (per-batch block too large for VMEM) ----
    thw = _choose_spatial_tile(hw_pad, c, itemsize, cap)
    n_hw = hw_pad // thw
    # Split the pooling reduction into 2 parallel halves so both TensorCores
    # (v7x megacore) are busy even at batch size 1.
    n_par = 2 if (n_hw % 2 == 0 and n_hw >= 2) else 1
    n_steps = n_hw // n_par

    # Pass 1: spatial partial sums only (no weights in the pipeline).
    sums = pl.pallas_call(
        _se_pool_kernel,
        out_shape=jax.ShapeDtypeStruct((b, n_par, c, 1), jnp.float32),
        grid_spec=pltpu.PrefetchScalarGridSpec(
            num_scalar_prefetch=0,
            grid=(b, n_par, n_steps),
            in_specs=[pl.BlockSpec((1, c, thw),
                                   lambda i, p, j: (i, 0, p * n_steps + j))],
            out_specs=pl.BlockSpec((1, 1, c, 1), lambda i, p, j: (i, p, 0, 0)),
        ),
        compiler_params=pltpu.CompilerParams(
            dimension_semantics=("parallel", "parallel", "arbitrary"),
            vmem_limit_bytes=_SCOPED_VMEM_BYTES),
    )(x3)

    # Excitation MLP in plain JAX, batched over b (sane MXU shape, f32).
    pooled = jnp.sum(sums, axis=1)[..., 0] * inv_hw                     # (b, c)
    hid = jax.nn.relu(pooled @ w1.astype(jnp.float32).T + b1.astype(jnp.float32))
    scale = jax.nn.sigmoid(hid @ w2.astype(jnp.float32).T + b2.astype(jnp.float32))
    scale = scale[..., None]                                            # (b, c, 1) f32

    # Pass 2: broadcast gate over spatial and multiply (fully parallel).
    out = pl.pallas_call(
        _se_scale_kernel,
        out_shape=jax.ShapeDtypeStruct((b, c, hw_pad), x.dtype),
        grid_spec=pltpu.PrefetchScalarGridSpec(
            num_scalar_prefetch=0,
            grid=(b, n_hw),
            in_specs=[
                pl.BlockSpec((1, c, thw), lambda i, j: (i, 0, j)),
                pl.BlockSpec((1, c, 1), lambda i, j: (i, 0, 0)),
            ],
            out_specs=pl.BlockSpec((1, c, thw), lambda i, j: (i, 0, j)),
        ),
        compiler_params=pltpu.CompilerParams(
            dimension_semantics=("parallel", "parallel"),
            vmem_limit_bytes=_SCOPED_VMEM_BYTES),
    )(x3, scale)

    return out[:, :, :hw].reshape(b, c, h, w)


# ----------------------------- reference & test -----------------------------


def se_reference(x, w1, b1, w2, b2):
    pooled = jnp.mean(x.astype(jnp.float32), axis=(2, 3))               # (b, c)
    h1 = jax.nn.relu(pooled @ w1.astype(jnp.float32).T + b1.astype(jnp.float32))
    s = jax.nn.sigmoid(h1 @ w2.astype(jnp.float32).T + b2.astype(jnp.float32))
    return (x.astype(jnp.float32) * s[:, :, None, None]).astype(x.dtype)


def _make_inputs(key, b, c, hgt, wdt, squeeze_c, dtype=jnp.float32):
    kx, kw1, kb1, kw2, kb2 = jax.random.split(key, 5)
    x = jax.random.normal(kx, (b, c, hgt, wdt), dtype=dtype)
    w1 = jax.random.normal(kw1, (squeeze_c, c), dtype=dtype) * 0.1
    b1 = jax.random.normal(kb1, (squeeze_c,), dtype=dtype) * 0.1
    w2 = jax.random.normal(kw2, (c, squeeze_c), dtype=dtype) * 0.1
    b2 = jax.random.normal(kb2, (c,), dtype=dtype) * 0.1
    return x, w1, b1, w2, b2


if __name__ == "__main__":
    key = jax.random.PRNGKey(0)
    k1, k2, k3 = jax.random.split(key, 3)

    # Test 1: fused single-pass path (hidden_dim=32, squeeze_factor=4, 16x16).
    x, w1, b1, w2, b2 = _make_inputs(k1, b=2, c=32, hgt=16, wdt=16, squeeze_c=8)
    out = jax.block_until_ready(se_pallas(x, w1, b1, w2, b2))
    ref = se_reference(x, w1, b1, w2, b2)
    assert out.shape == x.shape
    assert jnp.allclose(out, ref, atol=1e-5, rtol=1e-5)

    # Test 2: two-pass fallback with tiled spatial axis, megacore-split pooling,
    # batch size 1 (forced small block budget to exercise the tiling).
    x, w1, b1, w2, b2 = _make_inputs(k2, b=1, c=32, hgt=32, wdt=32, squeeze_c=8)
    out = jax.block_until_ready(
        se_pallas(x, w1, b1, w2, b2, force_two_pass=True,
                  max_block_bytes=32 * 128 * 4))
    ref = se_reference(x, w1, b1, w2, b2)
    assert out.shape == x.shape
    assert jnp.allclose(out, ref, atol=1e-5, rtol=1e-5)

    # Test 3: spatial extent not a multiple of 128 (zero-padding path).
    x, w1, b1, w2, b2 = _make_inputs(k3, b=2, c=32, hgt=10, wdt=10, squeeze_c=8)
    out = jax.block_until_ready(se_pallas(x, w1, b1, w2, b2))
    ref = se_reference(x, w1, b1, w2, b2)
    assert out.shape == x.shape
    assert jnp.allclose(out, ref, atol=1e-5, rtol=1e-5)

    print("KERNEL_OK")
</pallas_src>

<mosaic_0001>
module attributes {stable_mosaic.version = 11 : i64} {
  func.func @_se_fused_kernel(%arg0: i32, %arg1: memref<1x32x256xf32, #tpu.memory_space<vmem>>, %arg2: memref<8x32xf32, #tpu.memory_space<vmem>>, %arg3: memref<8x1xf32, #tpu.memory_space<vmem>>, %arg4: memref<32x8xf32, #tpu.memory_space<vmem>>, %arg5: memref<32x1xf32, #tpu.memory_space<vmem>>, %arg6: memref<1x32x256xf32, #tpu.memory_space<vmem>>) attributes {dimension_semantics = [#tpu.dimension_semantics<parallel>], iteration_bounds = array<i64: 2>, scalar_prefetch = 0 : i64, scratch_operands = 0 : i64, tpu.core_type = #tpu.core_type<tc>, window_params = [{transform_indices = @transform_0, window_bounds = array<i64: 1, 32, 256>}, {pipeline_mode = #tpu.pipeline_mode<synchronous>, transform_indices = @transform_1, window_bounds = array<i64: 8, 32>}, {pipeline_mode = #tpu.pipeline_mode<synchronous>, transform_indices = @transform_2, window_bounds = array<i64: 8, 1>}, {pipeline_mode = #tpu.pipeline_mode<synchronous>, transform_indices = @transform_3, window_bounds = array<i64: 32, 8>}, {pipeline_mode = #tpu.pipeline_mode<synchronous>, transform_indices = @transform_4, window_bounds = array<i64: 32, 1>}, {transform_indices = @transform_5, window_bounds = array<i64: 1, 32, 256>}]} {
    %c0 = arith.constant 0 : index
    %c0_0 = arith.constant 0 : index
    %c0_1 = arith.constant 0 : index
    %0 = vector.load %arg1[%c0, %c0_0, %c0_1] : memref<1x32x256xf32, #tpu.memory_space<vmem>>, vector<1x32x256xf32>
    %1 = vector.shape_cast %0 : vector<1x32x256xf32> to vector<32x256xf32>
    %cst = arith.constant dense<0.000000e+00> : vector<32xf32>
    %2 = vector.multi_reduction <add>, %1, %cst [1] : vector<32x256xf32> to vector<32xf32>
    %3 = vector.shape_cast %2 : vector<32xf32> to vector<32x1xf32>
    %cst_2 = arith.constant 3.906250e-03 : f32
    %4 = vector.broadcast %cst_2 : f32 to vector<32x1xf32>
    %5 = arith.mulf %3, %4 : vector<32x1xf32>
    %c0_3 = arith.constant 0 : index
    %c0_4 = arith.constant 0 : index
    %6 = vector.load %arg2[%c0_3, %c0_4] : memref<8x32xf32, #tpu.memory_space<vmem>>, vector<8x32xf32>
    %cst_5 = arith.constant dense<0.000000e+00> : vector<8x1xf32>
    %7 = tpu.matmul %6, %5, %cst_5 {dimension_numbers = #tpu.dot_dimension_numbers<[1], [0], [0], [1], [0, 0, 1, 1], [], []>} : vector<8x32xf32>, vector<32x1xf32>, vector<8x1xf32> -> vector<8x1xf32>
    %c0_6 = arith.constant 0 : index
    %c0_7 = arith.constant 0 : index
    %8 = vector.load %arg3[%c0_6, %c0_7] : memref<8x1xf32, #tpu.memory_space<vmem>>, vector<8x1xf32>
    %9 = arith.addf %7, %8 : vector<8x1xf32>
    %cst_8 = arith.constant 0.000000e+00 : f32
    %10 = vector.broadcast %cst_8 : f32 to vector<8x1xf32>
    %11 = arith.maximumf %9, %10 : vector<8x1xf32>
    %c0_9 = arith.constant 0 : index
    %c0_10 = arith.constant 0 : index
    %12 = vector.load %arg4[%c0_9, %c0_10] : memref<32x8xf32, #tpu.memory_space<vmem>>, vector<32x8xf32>
    %cst_11 = arith.constant dense<0.000000e+00> : vector<32x1xf32>
    %13 = tpu.matmul %12, %11, %cst_11 {dimension_numbers = #tpu.dot_dimension_numbers<[1], [0], [0], [1], [0, 0, 1, 1], [], []>} : vector<32x8xf32>, vector<8x1xf32>, vector<32x1xf32> -> vector<32x1xf32>
    %c0_12 = arith.constant 0 : index
    %c0_13 = arith.constant 0 : index
    %14 = vector.load %arg5[%c0_12, %c0_13] : memref<32x1xf32, #tpu.memory_space<vmem>>, vector<32x1xf32>
    %15 = arith.addf %13, %14 : vector<32x1xf32>
    %16 = arith.negf %15 : vector<32x1xf32>
    %17 = math.exp %16 : vector<32x1xf32>
    %cst_14 = arith.constant 1.000000e+00 : f32
    %18 = vector.broadcast %cst_14 : f32 to vector<32x1xf32>
    %19 = arith.addf %18, %17 : vector<32x1xf32>
    %20 = arith.divf %18, %19 : vector<32x1xf32>
    %21 = vector.broadcast %20 : vector<32x1xf32> to vector<32x256xf32>
    %22 = arith.mulf %1, %21 : vector<32x256xf32>
    %c0_15 = arith.constant 0 : index
    %c0_16 = arith.constant 0 : index
    %c0_17 = arith.constant 0 : index
    %23 = vector.load %arg6[%c0_15, %c0_16, %c0_17] : memref<1x32x256xf32, #tpu.memory_space<vmem>>, vector<1x32x256xf32>
    %24 = vector.shape_cast %23 : vector<1x32x256xf32> to vector<32x256xf32>
    %25 = vector.shape_cast %22 : vector<32x256xf32> to vector<1x32x256xf32>
    tpu.vector_store %arg6[%c0_15, %c0_16, %c0_17], %25 {strides = array<i32>} : memref<1x32x256xf32, #tpu.memory_space<vmem>>, vector<1x32x256xf32>,
    return
  }
  func.func @transform_0(%arg0: i32) -> (i32, i32, i32) {
    %c0_i32 = arith.constant 0 : i32
    %c0_i32_0 = arith.constant 0 : i32
    %c0_i32_1 = arith.constant 0 : i32
    return %arg0, %c0_i32, %c0_i32_0 : i32, i32, i32
  }
  func.func @transform_1(%arg0: i32) -> (i32, i32) {
    %c0_i32 = arith.constant 0 : i32
    %c0_i32_0 = arith.constant 0 : i32
    %c0_i32_1 = arith.constant 0 : i32
    return %c0_i32, %c0_i32_0 : i32, i32
  }
  func.func @transform_2(%arg0: i32) -> (i32, i32) {
    %c0_i32 = arith.constant 0 : i32
    %c0_i32_0 = arith.constant 0 : i32
    %c0_i32_1 = arith.constant 0 : i32
    return %c0_i32, %c0_i32_0 : i32, i32
  }
  func.func @transform_3(%arg0: i32) -> (i32, i32) {
    %c0_i32 = arith.constant 0 : i32
    %c0_i32_0 = arith.constant 0 : i32
    %c0_i32_1 = arith.constant 0 : i32
    return %c0_i32, %c0_i32_0 : i32, i32
  }
  func.func @transform_4(%arg0: i32) -> (i32, i32) {
    %c0_i32 = arith.constant 0 : i32
    %c0_i32_0 = arith.constant 0 : i32
    %c0_i32_1 = arith.constant 0 : i32
    return %c0_i32, %c0_i32_0 : i32, i32
  }
  func.func @transform_5(%arg0: i32) -> (i32, i32, i32) {
    %c0_i32 = arith.constant 0 : i32
    %c0_i32_0 = arith.constant 0 : i32
    %c0_i32_1 = arith.constant 0 : i32
    return %arg0, %c0_i32, %c0_i32_0 : i32, i32, i32
  }
}

</mosaic_0001>

<llo_original>
// kernel: tpu_custom_call.1
$region0: #{tpu_custom_call.1}
  #allocation0 [shape = 'u32[]', space=smem, size = 0x4, offset = 0x4, fixed_abs, tag = 'smem constant byte address 0x4 - core index']
  #allocation1 [shape = 'u32[144,128]{1,0:T(1,128)}', space=vmem, size = 0x12000, scoped, tag = 'internal scratch']
  %s0 = inlined_call_operand.hbm [shape: f32[2,32,256], index: 0, kind: input, shape index: {}]
  %s1 = inlined_call_operand.vmem [shape: f32[8,32], index: 1, kind: input, shape index: {}]
  %s2 = inlined_call_operand.vmem [shape: f32[8,1], index: 2, kind: input, shape index: {}]
  %s3 = inlined_call_operand.vmem [shape: f32[32,8], index: 3, kind: input, shape index: {}]
  %s4 = inlined_call_operand.vmem [shape: f32[32,1], index: 4, kind: input, shape index: {}]
  %s5 = inlined_call_operand.hbm [shape: f32[2,32,256], index: 5, kind: output, shape index: {}]
  %s6 = sld [smem:[#allocation0]]
  $region57: #{tpu_custom_call.1} parent=0
    _
  %s8 = ssub.s32 1, %s6
  %s9 = scalar_select 0, %s8, %s6
  $region1: #{tpu_custom_call.1} parent=0
    #allocation2 [shape = 'u8[65536]{0}', space=vmem, size = 0x10000, scoped, tag = 'input window, operand 0']
    #allocation3 [shape = 's32[2]{0}', space=sflag, size = 0x8, scoped, tag = 'scoped memory for tpu_custom_call.1']
    #allocation4 [shape = 's32[2]{0}', space=sflag, size = 0x8, scoped, tag = 'scoped memory for tpu_custom_call.1']
    #allocation5 [shape = 'u8[65536]{0}', space=vmem, size = 0x10000, scoped, tag = 'output window, operand 0']
    %10 = vsyncpa [#allocation3], 0
    %s11 = scalar_lea.sflag [#allocation3], 1
    %12 = vsyncpa %s11, 0
    %13 = vsyncpa [#allocation4], 0
    %s14 = scalar_lea.sflag [#allocation4], 1
    %15 = vsyncpa %s14, 0
    loop: start=0, step=1, limit=4
    $region2: #{tpu_custom_call.1} parent=1 // loop_pre_header
      _
    $region3: #{tpu_custom_call.1} parent=1 // loop_header
      %s17 = sphi 0, %s21
      %p18 = scmp.ge.s32.totalorder %s17, 4
      %s27 = sphi 0, %s29
      %s30 = sphi 0, %s27
      %s31 = sphi 0, %s30
      %s47 = sphi 0, %s31
      %s51 = sphi 0, %s51
      %s53 = sphi 0, %s51
      %s54 = sphi 0, %s53
      %s68 = sphi 0, %s54
      %s72 = sphi 0, %s72
      %s74 = sphi 0, %s72
      %s75 = sphi 0, %s74
      %s89 = sphi 0, %s75
      %s93 = sphi 0, %s93
      %s95 = sphi 0, %s93
      %s96 = sphi 0, %s95
      %s110 = sphi 0, %s96
      %s114 = sphi 0, %s114
      %s116 = sphi 0, %s114
      %s117 = sphi 0, %s116
      %s131 = sphi 0, %s117
      %s137 = sphi 0, %s139
      %s140 = sphi 0, %s137
      %s141 = sphi 0, %s140
      %s157 = sphi 0, %s141
    $region4: #{tpu_custom_call.1} parent=1 // loop_header_branch
      %20 = sbr.rel (%p18) target = $region8
    $region5: #{tpu_custom_call.1} parent=1 // loop_body
      %s22 = ssub.s32 %s17, 1
      %s23 = ssub.s32 %s17, 2
      %s24 = sadd.s32 %s17, 1
      %s25 = ssub.s32 %s17, %s24
      %p26 = scmp.eq.s32.totalorder %s25, 0
      %s28 = sadd.s32 %s27, 1
      %s29 = scalar_select %p26, %s27, %s28
      %p32 = pneg %p26
      %p33 = scmp.eq.s32.totalorder %s17, 1
      %p34 = por %p32, %p33
      %p35 = scmp.ne.s32.totalorder %s27, %s30
      %p36 = scmp.eq.s32.totalorder %s17, 0
      %p37 = por %p35, %p36
      %p38 = scmp.ne.s32.totalorder %s27, %s30
      %p39 = scmp.eq.s32.totalorder %s22, 1
      %p40 = por %p38, %p39
      %p41 = scmp.ne.s32.totalorder %s30, %s31
      %p42 = scmp.eq.s32.totalorder %s22, 0
      %p43 = por %p41, %p42
      %p44 = scmp.ne.s32.totalorder %s30, %s31
      %p45 = scmp.eq.s32.totalorder %s23, 1
      %p46 = por %p44, %p45
      %p48 = scmp.ne.s32.totalorder %s31, %s47
      %p49 = scmp.eq.s32.totalorder %s23, 0
      %p50 = por %p48, %p49
      %s52 = sadd.s32 %s51, 1
      %p55 = scmp.eq.s32.totalorder %s17, 1
      %p56 = scmp.ne.s32.totalorder %s51, %s53
      %p57 = scmp.eq.s32.totalorder %s17, 0
      %p58 = por %p56, %p57
      %p59 = scmp.ne.s32.totalorder %s51, %s53
      %p60 = scmp.eq.s32.totalorder %s22, 1
      %p61 = por %p59, %p60
      %p62 = scmp.ne.s32.totalorder %s53, %s54
      %p63 = scmp.eq.s32.totalorder %s22, 0
      %p64 = por %p62, %p63
      %p65 = scmp.ne.s32.totalorder %s53, %s54
      %p66 = scmp.eq.s32.totalorder %s23, 1
      %p67 = por %p65, %p66
      %p69 = scmp.ne.s32.totalorder %s54, %s68
      %p70 = scmp.eq.s32.totalorder %s23, 0
      %p71 = por %p69, %p70
      %s73 = sadd.s32 %s72, 1
      %p76 = scmp.eq.s32.totalorder %s17, 1
      %p77 = scmp.ne.s32.totalorder %s72, %s74
      %p78 = scmp.eq.s32.totalorder %s17, 0
      %p79 = por %p77, %p78
      %p80 = scmp.ne.s32.totalorder %s72, %s74
      %p81 = scmp.eq.s32.totalorder %s22, 1
      %p82 = por %p80, %p81
      %p83 = scmp.ne.s32.totalorder %s74, %s75
      %p84 = scmp.eq.s32.totalorder %s22, 0
      %p85 = por %p83, %p84
      %p86 = scmp.ne.s32.totalorder %s74, %s75
      %p87 = scmp.eq.s32.totalorder %s23, 1
      %p88 = por %p86, %p87
      %p90 = scmp.ne.s32.totalorder %s75, %s89
      %p91 = scmp.eq.s32.totalorder %s23, 0
      %p92 = por %p90, %p91
      %s94 = sadd.s32 %s93, 1
      %p97 = scmp.eq.s32.totalorder %s17, 1
      %p98 = scmp.ne.s32.totalorder %s93, %s95
      %p99 = scmp.eq.s32.totalorder %s17, 0
      %p100 = por %p98, %p99
      %p101 = scmp.ne.s32.totalorder %s93, %s95
      %p102 = scmp.eq.s32.totalorder %s22, 1
      %p103 = por %p101, %p102
      %p104 = scmp.ne.s32.totalorder %s95, %s96
      %p105 = scmp.eq.s32.totalorder %s22, 0
      %p106 = por %p104, %p105
      %p107 = scmp.ne.s32.totalorder %s95, %s96
      %p108 = scmp.eq.s32.totalorder %s23, 1
      %p109 = por %p107, %p108
      %p111 = scmp.ne.s32.totalorder %s96, %s110
      %p112 = scmp.eq.s32.totalorder %s23, 0
      %p113 = por %p111, %p112
      %s115 = sadd.s32 %s114, 1
      %p118 = scmp.eq.s32.totalorder %s17, 1
      %p119 = scmp.ne.s32.totalorder %s114, %s116
      %p120 = scmp.eq.s32.totalorder %s17, 0
      %p121 = por %p119, %p120
      %p122 = scmp.ne.s32.totalorder %s114, %s116
      %p123 = scmp.eq.s32.totalorder %s22, 1
      %p124 = por %p122, %p123
      %p125 = scmp.ne.s32.totalorder %s116, %s117
      %p126 = scmp.eq.s32.totalorder %s22, 0
      %p127 = por %p125, %p126
      %p128 = scmp.ne.s32.totalorder %s116, %s117
      %p129 = scmp.eq.s32.totalorder %s23, 1
      %p130 = por %p128, %p129
      %p132 = scmp.ne.s32.totalorder %s117, %s131
      %p133 = scmp.eq.s32.totalorder %s23, 0
      %p134 = por %p132, %p133
      %s135 = ssub.s32 %s17, %s24
      %p136 = scmp.eq.s32.totalorder %s135, 0
      %s138 = sadd.s32 %s137, 1
      %s139 = scalar_select %p136, %s137, %s138
      %p142 = pneg %p136
      %p143 = scmp.eq.s32.totalorder %s17, 1
      %p144 = por %p142, %p143
      %p145 = scmp.ne.s32.totalorder %s137, %s140
      %p146 = scmp.eq.s32.totalorder %s17, 0
      %p147 = por %p145, %p146
      %p148 = scmp.ne.s32.totalorder %s137, %s140
      %p149 = scmp.eq.s32.totalorder %s22, 1
      %p150 = por %p148, %p149
      %p151 = scmp.ne.s32.totalorder %s140, %s141
      %p152 = scmp.eq.s32.totalorder %s22, 0
      %p153 = por %p151, %p152
      %p154 = scmp.ne.s32.totalorder %s140, %s141
      %p155 = scmp.eq.s32.totalorder %s23, 1
      %p156 = por %p154, %p155
      %p158 = scmp.ne.s32.totalorder %s141, %s157
      %p159 = scmp.eq.s32.totalorder %s23, 0
      %p160 = por %p158, %p159
      %p161 = scmp.le.s32.totalorder 1, %s17
      %p162 = scmp.lt.s32.totalorder %s17, 3
      %p163 = pnand %p161, %p162
      %p164 = pneg %p163
      // Predicated region
      $region9: #{tpu_custom_call.1} parent=5 // pred_check
        _
      $region10: #{tpu_custom_call.1} parent=5 // pred_check_branch
        %166 = sbr.rel (%p163) target = $region12
      $region11: #{tpu_custom_call.1} parent=5 // pred_region
        %s167 = ssub.s32 %s17, 1
        // Predicated region
        $region13: #{tpu_custom_call.1} parent=11 // pred_check
          %p168 = pneg %p64
        $region14: #{tpu_custom_call.1} parent=11 // pred_check_branch
          %170 = sbr.rel (%p168) target = $region16
        $region15: #{tpu_custom_call.1} parent=11 // pred_region
          _
        $region16: #{tpu_custom_call.1} parent=11 // pred_fallthru
          _
        // Predicated region
        $region17: #{tpu_custom_call.1} parent=11 // pred_check
          %p171 = pneg %p85
        $region18: #{tpu_custom_call.1} parent=11 // pred_check_branch
          %173 = sbr.rel (%p171) target = $region20
        $region19: #{tpu_custom_call.1} parent=11 // pred_region
          _
        $region20: #{tpu_custom_call.1} parent=11 // pred_fallthru
          _
        // Predicated region
        $region21: #{tpu_custom_call.1} parent=11 // pred_check
          %p174 = pneg %p106
        $region22: #{tpu_custom_call.1} parent=11 // pred_check_branch
          %176 = sbr.rel (%p174) target = $region24
        $region23: #{tpu_custom_call.1} parent=11 // pred_region
          _
        $region24: #{tpu_custom_call.1} parent=11 // pred_fallthru
          _
        // Predicated region
        $region25: #{tpu_custom_call.1} parent=11 // pred_check
          %p177 = pneg %p127
        $region26: #{tpu_custom_call.1} parent=11 // pred_check_branch
          %179 = sbr.rel (%p177) target = $region28
        $region27: #{tpu_custom_call.1} parent=11 // pred_region
          _
        $region28: #{tpu_custom_call.1} parent=11 // pred_fallthru
          _
      $region12: #{tpu_custom_call.1} parent=5 // pred_fallthru
        _
      %p180 = scmp.lt.s32.totalorder %s17, 2
      // Predicated region
      $region29: #{tpu_custom_call.1} parent=5 // pred_check
        %p181 = pneg %p180
      $region30: #{tpu_custom_call.1} parent=5 // pred_check_branch
        %183 = sbr.rel (%p181) target = $region32
      $region31: #{tpu_custom_call.1} parent=5 // pred_region
        // Predicated region
        $region33: #{tpu_custom_call.1} parent=31 // pred_check
          %p184 = pneg %p37
        $region34: #{tpu_custom_call.1} parent=31 // pred_check_branch
          %186 = sbr.rel (%p184) target = $region36
        $region35: #{tpu_custom_call.1} parent=31 // pred_region
          %s187 = sand.u32 %s27, 1
          %s188 = scalar_lea.sflag [#allocation3], %s187
          %s189 = sand.u32 %s27, 1
          %s190 = smul.addr %s189, 64
          %s191 = scalar_lea.vmem [#allocation2], %s190
          %s193 = ssub.s32 1024, 1024
          %194 = vsyncadd %s188, %s193
          %s195 = smul.addr %s17, 8
          %s196 = smul.addr %s195, 128
          %s197 = scalar_lea.hbm %s0, %s196
          %s198 = sshll.u32 %s191, 4
          %s199 = int_to_ptr.vmem [resolvable:$true] %s198
          %204 = dma.hbm_to_vmem [thread:$0]  %s197, 1024, %s199, %s188, 256, 256, 16
        $region36: #{tpu_custom_call.1} parent=31 // pred_fallthru
          _
      $region32: #{tpu_custom_call.1} parent=5 // pred_fallthru
        _
      %p205 = scmp.le.s32.totalorder 1, %s17
      %p206 = scmp.lt.s32.totalorder %s17, 3
      %p207 = pnand %p205, %p206
      %p208 = pneg %p207
      // Predicated region
      $region37: #{tpu_custom_call.1} parent=5 // pred_check
        _
      $region38: #{tpu_custom_call.1} parent=5 // pred_check_branch
        %210 = sbr.rel (%p207) target = $region40
      $region39: #{tpu_custom_call.1} parent=5 // pred_region
        %s211 = ssub.s32 %s17, 1
        %s212 = sand.u32 %s30, 1
        %s213 = scalar_lea.sflag [#allocation3], %s212
        %s214 = sand.u32 %s30, 1
        %s215 = smul.addr %s214, 64
        %s216 = scalar_lea.vmem [#allocation2], %s215
        // Predicated region
        $region41: #{tpu_custom_call.1} parent=39 // pred_check
          %p217 = pneg %p43
        $region42: #{tpu_custom_call.1} parent=39 // pred_check_branch
          %219 = sbr.rel (%p217) target = $region44
        $region43: #{tpu_custom_call.1} parent=39 // pred_region
          %220 = dma.done %s213, 1024
        $region44: #{tpu_custom_call.1} parent=39 // pred_fallthru
          _
        %s221 = sand.u32 %s30, 1
        %s222 = scalar_lea.sflag [#allocation3], %s221
        %s223 = sand.u32 %s30, 1
        %s224 = smul.addr %s223, 64
        %s225 = scalar_lea.vmem [#allocation2], %s224
        %p226 = pneg %p43
        %p227 = pneg %p40
        %p228 = pneg %p64
        %p229 = pneg %p61
        %p230 = pneg %p85
        %p231 = pneg %p82
        %p232 = pneg %p106
        %p233 = pneg %p103
        %p234 = pneg %p127
        %p235 = pneg %p124
        %p236 = pneg %p153
        %p237 = pneg %p150
        %s238 = sand.u32 %s140, 1
        %s239 = scalar_lea.sflag [#allocation4], %s238
        %s240 = sand.u32 %s140, 1
        %s241 = smul.addr %s240, 64
        %s242 = scalar_lea.vmem [#allocation5], %s241
        %v243 = vld [vmem:[%s216] sm:$0xff]
        %v244 = vld [vmem:[%s216 + $0x8] sm:$0xff]
        %v245 = vld [vmem:[%s216 + $0x10] sm:$0xff]
        %v246 = vld [vmem:[%s216 + $0x18] sm:$0xff]
        %v247 = vld [vmem:[%s216 + $0x20] sm:$0xff]
        %v248 = vld [vmem:[%s216 + $0x28] sm:$0xff]
        %v249 = vld [vmem:[%s216 + $0x30] sm:$0xff]
        %v250 = vld [vmem:[%s216 + $0x38] sm:$0xff]
        %v251 = vadd.f32 %v243, %v244
        %252 = vadd.xlane.f32.xlu0 %v251
        %v253 = vpop.xlane.xlu0 %252
        %v254 = vadd.f32 %v245, %v246
        %255 = vadd.xlane.f32.xlu0 %v254
        %v256 = vpop.xlane.xlu0 %255
        %v257 = vadd.f32 %v247, %v248
        %258 = vadd.xlane.f32.xlu0 %v257
        %v259 = vpop.xlane.xlu0 %258
        %v260 = vadd.f32 %v249, %v250
        %261 = vadd.xlane.f32.xlu0 %v260
        %v262 = vpop.xlane.xlu0 %261
        %v263 = vmul.f32 %v253, 0.00390625
        %v264 = vmul.f32 %v256, 0.00390625
        %v265 = vmul.f32 %v259, 0.00390625
        %v266 = vmul.f32 %v262, 0.00390625
        %v267 = vld [vmem:[%s1] sm:$0xff]
        %v268 = vld [vmem:[%s2] sm:$0xff]
        %vm269 = vcmask 261120
        %v271 = vsel %vm269, %v267, 0
        %273 = vmatprep.subr.mxu0 0.0
        %274 = vmatpush1.msra.mxu0 0.0
        %275 = vmatprep.subr.mxu0 0.0
        %276 = vmatpush1.msra.mxu0 0.0
        %277 = vmatprep.subr.mxu0 0.0
        %278 = vmatpush1.msra.mxu0 0.0
        %279 = vmatprep.subr.mxu0 0.0
        %280 = vmatpush1.msra.mxu0 0.0
        %281 = vmatprep.subr.mxu0 0.0
        %282 = vmatpush1.msra.mxu0 0.0
        %283 = vmatprep.subr.mxu0 0.0
        %284 = vmatpush1.msra.mxu0 0.0
        %285 = vmatprep.subr.mxu0 0.0
        %286 = vmatpush1.msra.mxu0 0.0
        %287 = vmatprep.subr.mxu0 0.0
        %288 = vmatpush1.msra.mxu0 0.0
        %289 = vmatprep.subr.mxu0 0.0
        %290 = vmatpush1.msra.mxu0 0.0
        %291 = vmatprep.subr.mxu0 0.0
        %292 = vmatpush1.msra.mxu0 0.0
        %293 = vmatprep.subr.mxu0 0.0
        %294 = vmatpush1.msra.mxu0 0.0
        %295 = vmatprep.subr.mxu0 0.0
        %296 = vmatpush1.msra.mxu0 0.0
        %297 = vmatprep.subr.mxu0 0.0
        %298 = vmatpush1.msra.mxu0 %v266
        %299 = vmatprep.subr.mxu0 0.0
        %300 = vmatpush1.msra.mxu0 %v265
        %301 = vmatprep.subr.mxu0 0.0
        %302 = vmatpush1.msra.mxu0 %v264
        %303 = vmatprep.subr.mxu0 0.0
        %304 = vmatpush1.msra.mxu0 %v263
        %305 = vmatprep.subr.mxu0 0.0
        %306 = vmatpush2.msra.mxu0 0.0
        %307 = vmatprep.subr.mxu0 0.0
        %308 = vmatpush2.msra.mxu0 0.0
        %309 = vmatprep.subr.mxu0 0.0
        %310 = vmatpush2.msra.mxu0 0.0
        %311 = vmatprep.subr.mxu0 0.0
        %312 = vmatpush2.msra.mxu0 0.0
        %313 = vmatprep.subr.mxu0 0.0
        %314 = vmatpush2.msra.mxu0 0.0
        %315 = vmatprep.subr.mxu0 0.0
        %316 = vmatpush2.msra.mxu0 0.0
        %317 = vmatprep.subr.mxu0 0.0
        %318 = vmatpush2.msra.mxu0 0.0
        %319 = vmatprep.subr.mxu0 0.0
        %320 = vmatpush2.msra.mxu0 0.0
        %321 = vmatprep.subr.mxu0 0.0
        %322 = vmatpush2.msra.mxu0 0.0
        %323 = vmatprep.subr.mxu0 0.0
        %324 = vmatpush2.msra.mxu0 0.0
        %325 = vmatprep.subr.mxu0 0.0
        %326 = vmatpush2.msra.mxu0 0.0
        %327 = vmatprep.subr.mxu0 0.0
        %328 = vmatpush2.msra.mxu0 0.0
        %329 = vmatprep.subr.mxu0 0.0
        %330 = vmatpush2.msra.mxu0 0.0
        %331 = vmatprep.subr.mxu0 0.0
        %332 = vmatpush2.msra.mxu0 0.0
        %333 = vmatprep.subr.mxu0 0.0
        %334 = vmatpush2.msra.mxu0 0.0
        %335 = vmatprep.subr.mxu0 0.0
        %336 = vmatpush2.msra.mxu0 0.0
        %337 = vmatprep.mubr.f32.mxu0 0.0
        %338 = vmatmul.mubr.f32.gmra.mxu0 %v271
        %v339 = vpop.f32.mrf.mxu0
        %v340 = vadd.f32 %v268, %v339
        %v341 = vpop.f32.mrf.mxu0
        %342 = vdwg.mxu0
        %v343 = vmax.f32 %v340, 0.0
        %v344 = vld [vmem:[%s3] sm:$0xff]
        %v345 = vld [vmem:[%s3 + $0x8] sm:$0xff]
        %v346 = vld [vmem:[%s3 + $0x10] sm:$0xff]
        %v347 = vld [vmem:[%s3 + $0x18] sm:$0xff]
        %v348 = vld [vmem:[%s4] sm:$0xff]
        %v349 = vld [vmem:[%s4 + $0x8] sm:$0xff]
        %v350 = vld [vmem:[%s4 + $0x10] sm:$0xff]
        %v351 = vld [vmem:[%s4 + $0x18] sm:$0xff]
        %vm352 = vcmask 64512
        %v354 = vsel %vm352, %v344, 0
        %v357 = vsel %vm352, %v345, 0
        %v360 = vsel %vm352, %v346, 0
        %v363 = vsel %vm352, %v347, 0
        %365 = vmatprep.subr.mxu0 0.0
        %366 = vmatpush1.msra.mxu0 0.0
        %367 = vmatprep.subr.mxu0 0.0
        %368 = vmatpush1.msra.mxu0 0.0
        %369 = vmatprep.subr.mxu0 0.0
        %370 = vmatpush1.msra.mxu0 0.0
        %371 = vmatprep.subr.mxu0 0.0
        %372 = vmatpush1.msra.mxu0 0.0
        %373 = vmatprep.subr.mxu0 0.0
        %374 = vmatpush1.msra.mxu0 0.0
        %375 = vmatprep.subr.mxu0 0.0
        %376 = vmatpush1.msra.mxu0 0.0
        %377 = vmatprep.subr.mxu0 0.0
        %378 = vmatpush1.msra.mxu0 0.0
        %379 = vmatprep.subr.mxu0 0.0
        %380 = vmatpush1.msra.mxu0 0.0
        %381 = vmatprep.subr.mxu0 0.0
        %382 = vmatpush1.msra.mxu0 0.0
        %383 = vmatprep.subr.mxu0 0.0
        %384 = vmatpush1.msra.mxu0 0.0
        %385 = vmatprep.subr.mxu0 0.0
        %386 = vmatpush1.msra.mxu0 0.0
        %387 = vmatprep.subr.mxu0 0.0
        %388 = vmatpush1.msra.mxu0 0.0
        %389 = vmatprep.subr.mxu0 0.0
        %390 = vmatpush1.msra.mxu0 0.0
        %391 = vmatprep.subr.mxu0 0.0
        %392 = vmatpush1.msra.mxu0 0.0
        %393 = vmatprep.subr.mxu0 0.0
        %394 = vmatpush1.msra.mxu0 0.0
        %395 = vmatprep.subr.mxu0 0.0
        %396 = vmatpush1.msra.mxu0 %v343
        %397 = vmatprep.subr.mxu0 0.0
        %398 = vmatpush2.msra.mxu0 0.0
        %399 = vmatprep.subr.mxu0 0.0
        %400 = vmatpush2.msra.mxu0 0.0
        %401 = vmatprep.subr.mxu0 0.0
        %402 = vmatpush2.msra.mxu0 0.0
        %403 = vmatprep.subr.mxu0 0.0
        %404 = vmatpush2.msra.mxu0 0.0
        %405 = vmatprep.subr.mxu0 0.0
        %406 = vmatpush2.msra.mxu0 0.0
        %407 = vmatprep.subr.mxu0 0.0
        %408 = vmatpush2.msra.mxu0 0.0
        %409 = vmatprep.subr.mxu0 0.0
        %410 = vmatpush2.msra.mxu0 0.0
        %411 = vmatprep.subr.mxu0 0.0
        %412 = vmatpush2.msra.mxu0 0.0
        %413 = vmatprep.subr.mxu0 0.0
        %414 = vmatpush2.msra.mxu0 0.0
        %415 = vmatprep.subr.mxu0 0.0
        %416 = vmatpush2.msra.mxu0 0.0
        %417 = vmatprep.subr.mxu0 0.0
        %418 = vmatpush2.msra.mxu0 0.0
        %419 = vmatprep.subr.mxu0 0.0
        %420 = vmatpush2.msra.mxu0 0.0
        %421 = vmatprep.subr.mxu0 0.0
        %422 = vmatpush2.msra.mxu0 0.0
        %423 = vmatprep.subr.mxu0 0.0
        %424 = vmatpush2.msra.mxu0 0.0
        %425 = vmatprep.subr.mxu0 0.0
        %426 = vmatpush2.msra.mxu0 0.0
        %427 = vmatprep.subr.mxu0 0.0
        %428 = vmatpush2.msra.mxu0 0.0
        %429 = vmatprep.mubr.f32.mxu0 0.0
        %430 = vmatmul.mubr.f32.gmra.mxu0 %v354
        %v431 = vpop.f32.mrf.mxu0
        %v432 = vadd.f32 %v348, %v431
        %v433 = vpop.f32.mrf.mxu0
        %434 = vmatprep.mubr.f32.mxu0 0.0
        %435 = vmatmul.mubr.f32.gmra.mxu0 %v357
        %v436 = vpop.f32.mrf.mxu0
        %v437 = vadd.f32 %v349, %v436
        %v438 = vpop.f32.mrf.mxu0
        %439 = vmatprep.mubr.f32.mxu0 0.0
        %440 = vmatmul.mubr.f32.gmra.mxu0 %v360
        %v441 = vpop.f32.mrf.mxu0
        %v442 = vadd.f32 %v350, %v441
        %v443 = vpop.f32.mrf.mxu0
        %444 = vmatprep.mubr.f32.mxu0 0.0
        %445 = vmatmul.mubr.f32.gmra.mxu0 %v363
        %v446 = vpop.f32.mrf.mxu0
        %v447 = vadd.f32 %v351, %v446
        %v448 = vpop.f32.mrf.mxu0
        %449 = vdwg.mxu0
        %v450 = vxor.u32 %v432, 2147483648
        %v451 = vxor.u32 %v437, 2147483648
        %v452 = vxor.u32 %v442, 2147483648
        %v453 = vxor.u32 %v447, 2147483648
        %v454 = vmul.f32 %v450, 1.442695
        %v455 = vpow.pop %v454
        %v456 = vmul.f32 %v451, 1.442695
        %v457 = vpow.pop %v456
        %v458 = vmul.f32 %v452, 1.442695
        %v459 = vpow.pop %v458
        %v460 = vmul.f32 %v453, 1.442695
        %v461 = vpow.pop %v460
        %v462 = vadd.f32 %v455, 1.0
        %v463 = vadd.f32 %v457, 1.0
        %v464 = vadd.f32 %v459, 1.0
        %v465 = vadd.f32 %v461, 1.0
        %v466 = vrcp.pop %v462
        %v467 = vmul.f32 1.0, %v466
        %v468 = vrcp.pop %v463
        %v469 = vmul.f32 1.0, %v468
        %v470 = vrcp.pop %v464
        %v471 = vmul.f32 1.0, %v470
        %v472 = vrcp.pop %v465
        %v473 = vmul.f32 1.0, %v472
        %475 = vset.pattern.permute.xlu0 0
        %476 = vperm.xlu0 %475, %v467
        %v477 = vpop.permute.xlu0 %476
        %480 = vset.pattern.permute.xlu0 0
        %481 = vperm.xlu0 %480, %v469
        %v482 = vpop.permute.xlu0 %481
        %485 = vset.pattern.permute.xlu0 0
        %486 = vperm.xlu0 %485, %v471
        %v487 = vpop.permute.xlu0 %486
        %490 = vset.pattern.permute.xlu0 0
        %491 = vperm.xlu0 %490, %v473
        %v492 = vpop.permute.xlu0 %491
        %v494 = vmul.f32 %v243, %v477
        %v495 = vmul.f32 %v244, %v477
        %v496 = vmul.f32 %v245, %v482
        %v497 = vmul.f32 %v246, %v482
        %v498 = vmul.f32 %v247, %v487
        %v499 = vmul.f32 %v248, %v487
        %v500 = vmul.f32 %v249, %v492
        %v501 = vmul.f32 %v250, %v492
        %502 = vst [vmem:[%s242] sm:$0xff] %v494
        %503 = vst [vmem:[%s242 + $0x8] sm:$0xff] %v495
        %504 = vst [vmem:[%s242 + $0x10] sm:$0xff] %v496
        %505 = vst [vmem:[%s242 + $0x18] sm:$0xff] %v497
        %506 = vst [vmem:[%s242 + $0x20] sm:$0xff] %v498
        %507 = vst [vmem:[%s242 + $0x28] sm:$0xff] %v499
        %508 = vst [vmem:[%s242 + $0x30] sm:$0xff] %v500
        %509 = vst [vmem:[%s242 + $0x38] sm:$0xff] %v501
        %s510 = sand.u32 %s140, 1
        %s511 = scalar_lea.sflag [#allocation4], %s510
        %s512 = sand.u32 %s140, 1
        %s513 = smul.addr %s512, 64
        %s514 = scalar_lea.vmem [#allocation5], %s513
        // Predicated region
        $region45: #{tpu_custom_call.1} parent=39 // pred_check
          %p515 = pneg %p150
        $region46: #{tpu_custom_call.1} parent=39 // pred_check_branch
          %517 = sbr.rel (%p515) target = $region48
        $region47: #{tpu_custom_call.1} parent=39 // pred_region
          %s519 = ssub.s32 1024, 1024
          %520 = vsyncadd %s511, %s519
          %s521 = smul.addr %s22, 8
          %s522 = smul.addr %s521, 128
          %s523 = scalar_lea.hbm %s5, %s522
          %s524 = sshll.u32 %s514, 4
          %s525 = int_to_ptr.vmem [resolvable:$true] %s524
          %530 = dma.vmem_to_hbm [thread:$0]  %s525, 1024, %s523, %s511, 256, 256, 16
        $region48: #{tpu_custom_call.1} parent=39 // pred_fallthru
          _
      $region40: #{tpu_custom_call.1} parent=5 // pred_fallthru
        _
      %p531 = scmp.le.s32.totalorder 2, %s17
      // Predicated region
      $region49: #{tpu_custom_call.1} parent=5 // pred_check
        %p532 = pneg %p531
      $region50: #{tpu_custom_call.1} parent=5 // pred_check_branch
        %534 = sbr.rel (%p532) target = $region52
      $region51: #{tpu_custom_call.1} parent=5 // pred_region
        %s535 = ssub.s32 %s17, 2
        // Predicated region
        $region53: #{tpu_custom_call.1} parent=51 // pred_check
          %p536 = pneg %p156
        $region54: #{tpu_custom_call.1} parent=51 // pred_check_branch
          %538 = sbr.rel (%p536) target = $region56
        $region55: #{tpu_custom_call.1} parent=51 // pred_region
          %s539 = sand.u32 %s141, 1
          %s540 = scalar_lea.sflag [#allocation4], %s539
          %s541 = sand.u32 %s141, 1
          %s542 = smul.addr %s541, 64
          %s543 = scalar_lea.vmem [#allocation5], %s542
          %544 = dma.done %s540, 1024
        $region56: #{tpu_custom_call.1} parent=51 // pred_fallthru
          _
      $region52: #{tpu_custom_call.1} parent=5 // pred_fallthru
        _
    $region6: #{tpu_custom_call.1} parent=1 // loop_footer
      %s21 = sadd.s32 1, %s17
    $region7: #{tpu_custom_call.1} parent=1 // loop_footer_branch
      %16 = sbr.rel target = $region3
    $region8: #{tpu_custom_call.1} parent=1 // loop_exit
      _
    %545 = vsyncpa [#allocation3], 1
    %s546 = scalar_lea.sflag [#allocation3], 1
    %547 = vsyncpa %s546, 1
    %548 = vsyncpa [#allocation4], 1
    %s549 = scalar_lea.sflag [#allocation4], 1
    %550 = vsyncpa %s549, 1

</llo_original>
